<compile_context>
chip_gen: v7x
topology: tpu7x:2x2x1
jax: 0.10.0
libtpu: 0.0.40
codegen_flags: <defaults>
</compile_context>

<pallas_src>
import jax
import jax.numpy as jnp
from jax import lax
from jax.experimental import pallas as pl
from jax.experimental.pallas import tpu as pltpu

EPS = 1e-5  # nn.InstanceNorm2d default

# Module-level flags from the original VICRegORpt code path.
trainOrTest = True
networkHemispherical = False


def _instance_norm_kernel(x_ref, o_ref):
    # x_ref block: (TM, H*W) -- TM instances, each row one full spatial slice.
    # Single-pass sum / sum-of-squares with f32 accumulation: no full-tile
    # centered temporary is kept live across the reductions.
    x = x_ref[...]
    n_inv = jnp.float32(1.0) / jnp.float32(x_ref.shape[-1])
    mean = jnp.sum(x, axis=-1, keepdims=True, dtype=jnp.float32) * n_inv
    ex2 = jnp.sum(x * x, axis=-1, keepdims=True, dtype=jnp.float32) * n_inv
    var = jnp.maximum(ex2 - mean * mean, 0.0)   # clamp: no NaN from cancellation
    inv = lax.rsqrt(var + jnp.float32(EPS))
    o_ref[...] = ((x.astype(jnp.float32) - mean) * inv).astype(o_ref.dtype)


def _pick_block_rows(rows, hw, itemsize):
    """Pick the row-tile size.

    Preference order:
      (a) a divisor of rows = N*C (no wrapper pad / output slice HBM passes),
      (b) a multiple of the sublane packing (8 rows f32, 16 rows bf16),
      (c) per-array window <= ~4 MiB (keeps double-buffered in+out windows plus
          transient f32 temporaries well inside the scoped-VMEM limit we set),
      (d) >= 4 grid steps when rows allow (v7x: 2 TensorCores x double-buffer).
    Returns (blk, rows_pad); rows_pad == rows on the no-padding path.
    """
    sub = max(8, 32 // itemsize)
    if rows <= sub:
        # Block first dim equals the full array dim -> (8,128) rule satisfied.
        return rows, rows
    max_tile_bytes = 4 * 1024 * 1024
    rows_by_vmem = max(sub, max_tile_bytes // max(1, hw * itemsize))
    if rows >= 4 * sub:
        target = rows // 4
    elif rows >= 2 * sub:
        target = rows // 2
    else:
        target = rows
    cap = max(sub, min(rows, rows_by_vmem, target, 4096))

    best = 0
    d = sub
    while d <= cap:                    # small trace-time loop (cap <= 4096)
        if rows % d == 0:
            best = d
        d += sub
    if best:
        return best, rows              # divisor found: no padding needed

    # Fallback: pad rows to a multiple of a sublane-aligned tile.  Per-row
    # reductions keep valid rows exact; padded (zero) rows are sliced off.
    blk = max(sub, (cap // sub) * sub)
    rows_pad = pl.cdiv(rows, blk) * blk
    return blk, rows_pad


def instance_norm2d(x):
    """InstanceNorm2d forward. x: (N, C, H, W), normalized per (n, c)."""
    N, C, H, W = x.shape
    rows, hw = N * C, H * W
    itemsize = jnp.dtype(x.dtype).itemsize

    # Lane-dense layout: each (n, c) instance becomes one contiguous row.
    # TODO(synk): for tiny feature maps (hw << 128, e.g. 7x7) a transposed
    # (H*W, N*C) layout would fill the lane axis; not needed when hw >= 128.
    x2 = x.reshape(rows, hw)

    blk, rows_pad = _pick_block_rows(rows, hw, itemsize)
    padded = rows_pad != rows
    if padded:
        x2 = jnp.pad(x2, ((0, rows_pad - rows), (0, 0)))
    grid = rows_pad // blk

    # VMEM accounting: double-buffered in + out windows plus ~2 tiles worth of
    # transient f32 temporaries inside the kernel.
    tile_bytes = blk * hw * itemsize
    vmem_need = 4 * tile_bytes + 2 * blk * hw * 4
    vmem_limit = int(min(max(48 << 20, int(vmem_need * 1.25)), 60 << 20))
    # TODO(synk): for very large H*W (hw*itemsize >> 4 MiB) split hw over a
    # second "arbitrary" grid axis with a two-step sum/sumsq reduction.

    out2 = pl.pallas_call(
        _instance_norm_kernel,
        out_shape=jax.ShapeDtypeStruct((rows_pad, hw), x.dtype),
        grid=(grid,),
        # Last block dim equals the full array dim (hw), so the (8,128) rule
        # holds even for odd feature-map sizes like 7x7.
        in_specs=[pl.BlockSpec((blk, hw), lambda i: (i, 0))],
        out_specs=pl.BlockSpec((blk, hw), lambda i: (i, 0)),
        compiler_params=pltpu.CompilerParams(
            dimension_semantics=("parallel",),   # shards across v7x's 2 TCs
            vmem_limit_bytes=vmem_limit,
        ),
    )(x2)

    if padded:
        out2 = out2[:rows]
    return out2.reshape(N, C, H, W)


class LayerNormLayer:
    """JAX/Pallas equivalent of the PyTorch LayerNormLayer module.

    nn.InstanceNorm2d(num_out_filters) with default args has no learnable
    parameters (affine=False) and no running stats, so it is stateless.
    """

    per_instance = True  # output of instance (n, c) depends only on x[n, c]

    def __init__(self, num_out_filters):
        self.num_out_filters = num_out_filters
        # TODO(synk): add per-channel gamma/beta here if affine=True were used.

    def __call__(self, x):
        assert x.shape[1] == self.num_out_filters
        return instance_norm2d(x)


class ArbitraryLayerVICregLocal:
    """Mirror of the PyTorch ArbitraryLayerVICregLocal forward pass."""

    def __init__(self, layerFunction):
        self.layerFunction = layerFunction

    def __call__(self, x):
        if trainOrTest and (not networkHemispherical):
            if getattr(self.layerFunction, "per_instance", False):
                # InstanceNorm acts independently on every (n, c) instance, so
                # split -> apply -> concat is numerically identical to one
                # fused pass over the full batch; fusing drops the concat copy
                # (a full HBM round-trip) and the second kernel launch.
                return self.layerFunction(x)
            batchSize = x.shape[0]
            x1, x2 = x[: batchSize // 2], x[batchSize // 2:]
            x1 = self.layerFunction(x1)
            x2 = self.layerFunction(x2)
            x = jnp.concatenate((x1, x2), axis=0)
        else:
            x = self.layerFunction(x)
        return x


def _reference_instance_norm(x):
    xf = x.astype(jnp.float32)
    mean = jnp.mean(xf, axis=(2, 3), keepdims=True)
    var = jnp.mean((xf - mean) ** 2, axis=(2, 3), keepdims=True)
    return ((xf - mean) / jnp.sqrt(var + EPS)).astype(x.dtype)


if __name__ == "__main__":
    key = jax.random.PRNGKey(0)
    N, C, H, W = 2, 4, 16, 16
    x = jax.random.normal(key, (N, C, H, W), dtype=jnp.float32)

    layer = ArbitraryLayerVICregLocal(LayerNormLayer(num_out_filters=C))
    y = layer(x)
    y = jax.block_until_ready(y)

    y_ref = _reference_instance_norm(x)
    assert y.shape == (N, C, H, W)
    assert jnp.allclose(y, y_ref, atol=1e-5, rtol=1e-5)

    print("KERNEL_OK")
</pallas_src>

<mosaic_0001>
module attributes {stable_mosaic.version = 11 : i64} {
  func.func @_instance_norm_kernel(%arg0: i32, %arg1: memref<8x256xf32, #tpu.memory_space<vmem>>, %arg2: memref<8x256xf32, #tpu.memory_space<vmem>>) attributes {dimension_semantics = [#tpu.dimension_semantics<parallel>], iteration_bounds = array<i64: 1>, scalar_prefetch = 0 : i64, scratch_operands = 0 : i64, tpu.core_type = #tpu.core_type<tc>, window_params = [{transform_indices = @transform_0, window_bounds = array<i64: 8, 256>}, {transform_indices = @transform_1, window_bounds = array<i64: 8, 256>}]} {
    %c0 = arith.constant 0 : index
    %c0_0 = arith.constant 0 : index
    %0 = vector.load %arg1[%c0, %c0_0] : memref<8x256xf32, #tpu.memory_space<vmem>>, vector<8x256xf32>
    %cst = arith.constant 1.000000e+00 : f32
    %cst_1 = arith.constant 2.560000e+02 : f32
    %1 = arith.divf %cst, %cst_1 : f32
    %cst_2 = arith.constant dense<0.000000e+00> : vector<8xf32>
    %2 = vector.multi_reduction <add>, %0, %cst_2 [1] : vector<8x256xf32> to vector<8xf32>
    %3 = vector.shape_cast %2 : vector<8xf32> to vector<8x1xf32>
    %4 = vector.broadcast %1 : f32 to vector<8x1xf32>
    %5 = arith.mulf %3, %4 : vector<8x1xf32>
    %6 = arith.mulf %0, %0 : vector<8x256xf32>
    %cst_3 = arith.constant dense<0.000000e+00> : vector<8xf32>
    %7 = vector.multi_reduction <add>, %6, %cst_3 [1] : vector<8x256xf32> to vector<8xf32>
    %8 = vector.shape_cast %7 : vector<8xf32> to vector<8x1xf32>
    %9 = vector.broadcast %1 : f32 to vector<8x1xf32>
    %10 = arith.mulf %8, %9 : vector<8x1xf32>
    %11 = arith.mulf %5, %5 : vector<8x1xf32>
    %12 = arith.subf %10, %11 : vector<8x1xf32>
    %cst_4 = arith.constant 0.000000e+00 : f32
    %13 = vector.broadcast %cst_4 : f32 to vector<8x1xf32>
    %14 = arith.maximumf %12, %13 : vector<8x1xf32>
    %cst_5 = arith.constant 9.99999974E-6 : f32
    %15 = vector.broadcast %cst_5 : f32 to vector<8x1xf32>
    %16 = arith.addf %14, %15 : vector<8x1xf32>
    %17 = math.rsqrt %16 : vector<8x1xf32>
    %18 = vector.broadcast %5 : vector<8x1xf32> to vector<8x256xf32>
    %19 = arith.subf %0, %18 : vector<8x256xf32>
    %20 = vector.broadcast %17 : vector<8x1xf32> to vector<8x256xf32>
    %21 = arith.mulf %19, %20 : vector<8x256xf32>
    %c0_6 = arith.constant 0 : index
    %c0_7 = arith.constant 0 : index
    %22 = vector.load %arg2[%c0_6, %c0_7] : memref<8x256xf32, #tpu.memory_space<vmem>>, vector<8x256xf32>
    tpu.vector_store %arg2[%c0_6, %c0_7], %21 {strides = array<i32>} : memref<8x256xf32, #tpu.memory_space<vmem>>, vector<8x256xf32>,
    return
  }
  func.func @transform_0(%arg0: i32) -> (i32, i32) {
    %c0_i32 = arith.constant 0 : i32
    %c0_i32_0 = arith.constant 0 : i32
    return %arg0, %c0_i32 : i32, i32
  }
  func.func @transform_1(%arg0: i32) -> (i32, i32) {
    %c0_i32 = arith.constant 0 : i32
    %c0_i32_0 = arith.constant 0 : i32
    return %arg0, %c0_i32 : i32, i32
  }
}

</mosaic_0001>

<llo_original>
// kernel: tpu_custom_call.1
$region0: #{tpu_custom_call.1}
  #allocation0 [shape = 'u32[]', space=smem, size = 0x4, offset = 0x4, fixed_abs, tag = 'smem constant byte address 0x4 - core index']
  #allocation1 [shape = 'u32[144,128]{1,0:T(1,128)}', space=vmem, size = 0x12000, scoped, tag = 'internal scratch']
  %s0 = inlined_call_operand.hbm [shape: f32[8,256], index: 0, kind: input, shape index: {}]
  %s1 = inlined_call_operand.hbm [shape: f32[8,256], index: 1, kind: output, shape index: {}]
  %s2 = sld [smem:[#allocation0]]
  $region18: #{tpu_custom_call.1} parent=0
    _
  %s4 = ssub.s32 1, %s2
  %s5 = scalar_select 0, %s4, %s2
  $region1: #{tpu_custom_call.1} parent=0
    #allocation2 [shape = 'u8[8192]{0}', space=vmem, size = 0x2000, scoped, tag = 'input window, operand 0, single buffered']
    #allocation3 [shape = 's32[1]{0}', space=sflag, size = 0x4, scoped, tag = 'scoped memory for tpu_custom_call.1']
    #allocation4 [shape = 's32[1]{0}', space=sflag, size = 0x4, scoped, tag = 'scoped memory for tpu_custom_call.1']
    #allocation5 [shape = 'u8[8192]{0}', space=vmem, size = 0x2000, scoped, tag = 'output window, operand 0, single buffered']
    %6 = vsyncpa [#allocation3], 0
    %7 = vsyncpa [#allocation4], 0
    // Predicated region
    $region2: #{tpu_custom_call.1} parent=1 // pred_check
      _
    $region3: #{tpu_custom_call.1} parent=1 // pred_check_branch
      %9 = sbr.rel (0) target = $region5
    $region4: #{tpu_custom_call.1} parent=1 // pred_region
      %s11 = ssub.s32 256, 256
      %12 = vsyncadd [#allocation3], %s11
      %s14 = sshll.u32 [#allocation2], 4
      %s15 = int_to_ptr.vmem [resolvable:$true] %s14
      %17 = dma.hbm_to_vmem [thread:$0]  %s0, 256, %s15, [#allocation3]
    $region5: #{tpu_custom_call.1} parent=1 // pred_fallthru
      _
    // Predicated region
    $region6: #{tpu_custom_call.1} parent=1 // pred_check
      _
    $region7: #{tpu_custom_call.1} parent=1 // pred_check_branch
      %19 = sbr.rel (0) target = $region9
    $region8: #{tpu_custom_call.1} parent=1 // pred_region
      %20 = dma.done [#allocation3], 256
    $region9: #{tpu_custom_call.1} parent=1 // pred_fallthru
      _
    %v21 = vld [vmem:[#allocation2] sm:$0xff]
    %v22 = vld [vmem:[#allocation2 + $0x8] sm:$0xff]
    %v23 = vadd.f32 %v21, %v22
    %24 = vadd.xlane.f32.xlu0 %v23
    %v25 = vpop.xlane.xlu0 %24
    %v26 = vmul.f32 %v25, 0.00390625
    %v27 = vmul.f32 %v21, %v21
    %v28 = vmul.f32 %v22, %v22
    %v29 = vadd.f32 %v27, %v28
    %30 = vadd.xlane.f32.xlu0 %v29
    %v31 = vpop.xlane.xlu0 %30
    %v32 = vmul.f32 %v31, 0.00390625
    %v33 = vmul.f32 %v26, %v26
    %v34 = vsub.f32 %v32, %v33
    %v35 = vmax.f32 %v34, 0.0
    %v36 = vadd.f32 %v35, 1e-05
    %v37 = vrsqrt.pop %v36
    %v38 = vsub.f32 %v21, %v26
    %v39 = vsub.f32 %v22, %v26
    %v40 = vmul.f32 %v38, %v37
    %v41 = vmul.f32 %v39, %v37
    %42 = vst [vmem:[#allocation5] sm:$0xff] %v40
    %43 = vst [vmem:[#allocation5 + $0x8] sm:$0xff] %v41
    // Predicated region
    $region10: #{tpu_custom_call.1} parent=1 // pred_check
      _
    $region11: #{tpu_custom_call.1} parent=1 // pred_check_branch
      %45 = sbr.rel (0) target = $region13
    $region12: #{tpu_custom_call.1} parent=1 // pred_region
      %s47 = ssub.s32 256, 256
      %48 = vsyncadd [#allocation4], %s47
      %s50 = sshll.u32 [#allocation5], 4
      %s51 = int_to_ptr.vmem [resolvable:$true] %s50
      %53 = dma.vmem_to_hbm [thread:$0]  %s51, 256, %s1, [#allocation4]
    $region13: #{tpu_custom_call.1} parent=1 // pred_fallthru
      _
    // Predicated region
    $region14: #{tpu_custom_call.1} parent=1 // pred_check
      _
    $region15: #{tpu_custom_call.1} parent=1 // pred_check_branch
      %55 = sbr.rel (0) target = $region17
    $region16: #{tpu_custom_call.1} parent=1 // pred_region
      %56 = dma.done [#allocation4], 256
    $region17: #{tpu_custom_call.1} parent=1 // pred_fallthru
      _
    %57 = vsyncpa [#allocation3], 1
    %58 = vsyncpa [#allocation4], 1

</llo_original>
